<compile_context>
chip_gen: v6e
topology: v6e:2x2x1
jax: 0.10.0
libtpu: 0.0.40
codegen_flags: <defaults>
</compile_context>

<pallas_src>
import functools

import jax
import jax.numpy as jnp
from jax.experimental import pallas as pl
from jax.experimental.pallas import tpu as pltpu

LANES = 128
_ROW_ALIGN = 8
_MIN_GRID_STEPS = 8   # keep both v7x TensorCores load-balanced for large N


# ----------------------------------------------------------------------------
# Kernel: per (tr, 128) tile of points compute
#   sd        = ||p - center|| - radius                         (SphereSDF)
#   e         = exp(-|sd| / beta)                                (single exp)
#   density   = where(sd>0, 0.5*alpha*e, alpha - 0.5*alpha*e)
#   out_dens  = -log1p(-density) / delta                         (in-kernel div)
#   out_feat  = clamp(|p - center|, 0.02, 0.98) * feature_param  (rainbow)
# ----------------------------------------------------------------------------
def sdf_volume_kernel(params_ref, pts_ref, delta_ref, dens_ref, feat_ref):
    # SMEM scalar params:
    # [cx, cy, cz, radius, 0.5*alpha, alpha, -1/beta, f0, f1, f2]
    cx = params_ref[0]
    cy = params_ref[1]
    cz = params_ref[2]
    radius = params_ref[3]
    half_alpha = params_ref[4]
    alpha = params_ref[5]
    neg_inv_beta = params_ref[6]
    f0 = params_ref[7]
    f1 = params_ref[8]
    f2 = params_ref[9]

    dx = pts_ref[0] - cx                      # (tr, 128)
    dy = pts_ref[1] - cy
    dz = pts_ref[2] - cz

    dist = jnp.sqrt(dx * dx + dy * dy + dz * dz)
    sd = dist - radius                        # signed distance (tr, 128)

    # single exponential serves both where-branches (and avoids overflow in the
    # unselected branch)
    e = jnp.exp(jnp.abs(sd) * neg_inv_beta)
    he = half_alpha * e
    density = jnp.where(sd > 0.0, he, alpha - he)

    # exact division in-kernel (kernel is HBM-bound; the single EUP slot has
    # >10x headroom), log1p for accuracy
    dens_ref[...] = (-jnp.log1p(-density) / delta_ref[...]).astype(dens_ref.dtype)

    # rainbow base color: direct per-row coordinate-major stores
    feat_ref[0] = (jnp.clip(jnp.abs(dx), 0.02, 0.98) * f0).astype(feat_ref.dtype)
    feat_ref[1] = (jnp.clip(jnp.abs(dy), 0.02, 0.98) * f1).astype(feat_ref.dtype)
    feat_ref[2] = (jnp.clip(jnp.abs(dz), 0.02, 0.98) * f2).astype(feat_ref.dtype)


# ----------------------------------------------------------------------------
# Parameter packing helper (scalars + hoisted reciprocal of beta)
# ----------------------------------------------------------------------------
def pack_params(center, radius, alpha, beta, feature_param):
    return jnp.concatenate([
        center.astype(jnp.float32),                                   # cx, cy, cz
        jnp.stack([radius, 0.5 * alpha, alpha, -1.0 / beta]).astype(jnp.float32),
        feature_param.astype(jnp.float32),                            # f0, f1, f2
    ])                                                                # (10,)


# ----------------------------------------------------------------------------
# Wrapper
# ----------------------------------------------------------------------------
@functools.partial(
    jax.jit,
    static_argnames=("tile_rows", "out_dtype", "points_layout", "feature_layout"))
def sdf_volume_forward(sample_points, sample_lengths, params, *,
                       tile_rows=2048, out_dtype=jnp.float32,
                       points_layout="point_major",
                       feature_layout="coord_major"):
    """SDFVolume forward.

    sample_points : [R, S, 3] (points_layout="point_major", module convention)
                    or [3, R, S] (points_layout="coord_major", preferred: skips
                    the input transpose pass).
    sample_lengths: [R, S, 1]
    params        : (10,) from pack_params().

    Returns dict with:
      'density': [N, 1]
      'feature': [3, N] (feature_layout="coord_major", default, no output
                 transpose pass) or [N, 3] (feature_layout="point_major",
                 strict module layout, costs one extra HBM pass).

    out_dtype=jnp.bfloat16 halves output HBM traffic if downstream tolerates it
    (arithmetic stays f32 inside the kernel).
    """
    # glue: delta computation along the per-ray sample axis (cheap [R,S] pass);
    # raw deltas go to the kernel, the reciprocal/division happens in-kernel.
    depth = sample_lengths[..., 0]                                    # [R, S]
    deltas = jnp.concatenate(
        [depth[..., 1:] - depth[..., :-1],
         1e10 * jnp.ones_like(depth[..., :1])], axis=-1)              # [R, S]
    deltas = deltas.reshape(-1).astype(jnp.float32)                   # [N]

    if points_layout == "coord_major":
        pts_t = sample_points.reshape(3, -1).astype(jnp.float32)      # [3, N] free
    else:
        # module-compatible [R, S, 3] -> [3, N]; one transpose that XLA may
        # fuse into the kernel operand via allow_input_fusion.
        pts_t = sample_points.reshape(-1, 3).T.astype(jnp.float32)
    N = pts_t.shape[1]

    # --- lane padding only (multiple of 128, needed for the [rows,128] view) --
    n_rows = -(-N // LANES)
    Np = n_rows * LANES
    n_pad = Np - N
    if n_pad:
        pts_t = jnp.pad(pts_t, ((0, 0), (0, n_pad)))
        deltas = jnp.pad(deltas, (0, n_pad), constant_values=1.0)     # avoid /0

    pts_3d = pts_t.reshape(3, n_rows, LANES)                          # [3, Nr, 128]
    deltas_2d = deltas.reshape(n_rows, LANES)                         # [Nr, 128]

    # --- tile height: multiple of 8 (or the full row dim when tiny), capped at
    # tile_rows, and sized so the 1-D parallel grid has >= ~8 steps for large N
    if n_rows <= _ROW_ALIGN:
        tr = n_rows                       # single/full block (full-dim exempt)
    else:
        tr = min(tile_rows, -(-n_rows // _MIN_GRID_STEPS))
        tr = max(_ROW_ALIGN, (tr // _ROW_ALIGN) * _ROW_ALIGN)
    grid = (pl.cdiv(n_rows, tr),)         # ragged last block handled by Pallas

    out_bytes = jnp.dtype(out_dtype).itemsize
    cost = pl.CostEstimate(
        flops=20 * Np,
        transcendentals=4 * Np,                       # sqrt, exp, log1p, div
        bytes_accessed=Np * (4 * 4 + 4 * out_bytes),  # 3 pts + delta in, 4 out
    )

    dens_t, feat_t = pl.pallas_call(
        sdf_volume_kernel,
        out_shape=(jax.ShapeDtypeStruct((n_rows, LANES), out_dtype),
                   jax.ShapeDtypeStruct((3, n_rows, LANES), out_dtype)),
        grid=grid,
        in_specs=[
            pl.BlockSpec(memory_space=pltpu.MemorySpace.SMEM),        # params
            pl.BlockSpec((3, tr, LANES), lambda i: (0, i, 0)),        # points
            pl.BlockSpec((tr, LANES), lambda i: (i, 0)),              # deltas
        ],
        out_specs=(
            pl.BlockSpec((tr, LANES), lambda i: (i, 0)),              # density
            pl.BlockSpec((3, tr, LANES), lambda i: (0, i, 0)),        # feature
        ),
        compiler_params=pltpu.CompilerParams(
            dimension_semantics=("parallel",),
            allow_input_fusion=[False, True, True],
        ),
        cost_estimate=cost,
    )(params, pts_3d, deltas_2d)

    # density [rows,128] -> [N,1]: pure reshape; slice only if lane padding.
    density = dens_t.reshape(-1)
    if n_pad:
        density = density[:N]
    density = density.reshape(N, 1)

    feature_cm = feat_t.reshape(3, -1)                                # [3, Np]
    if n_pad:
        feature_cm = feature_cm[:, :N]
    if feature_layout == "point_major":
        # strict PyTorch layout; costs one extra HBM pass.
        feature = feature_cm.T                                        # [N, 3]
    else:
        feature = feature_cm                                          # [3, N]
    return {"density": density, "feature": feature}


# ----------------------------------------------------------------------------
# Pure-JAX reference (mirrors the PyTorch forward exactly, point-major)
# ----------------------------------------------------------------------------
def sdf_volume_reference(sample_points, sample_lengths,
                         center, radius, alpha, beta, feature_param):
    pts = sample_points.reshape(-1, 3)
    sd = jnp.linalg.norm(pts - center[None, :], axis=-1,
                         keepdims=True) - radius                      # [N, 1]
    density = jnp.where(sd > 0,
                        0.5 * jnp.exp(-sd / beta),
                        1.0 - 0.5 * jnp.exp(sd / beta)) * alpha
    depth = sample_lengths[..., 0]
    deltas = jnp.concatenate(
        [depth[..., 1:] - depth[..., :-1],
         1e10 * jnp.ones_like(depth[..., :1])], axis=-1).reshape(-1, 1)
    out_density = -jnp.log(1.0 - density) / deltas
    base_color = jnp.clip(jnp.abs(pts - center[None, :]), 0.02, 0.98)
    out_feature = base_color * feature_param[None, :] * jnp.ones(
        (pts.shape[0], 1), jnp.float32)
    return {"density": out_density, "feature": out_feature}


if __name__ == "__main__":
    key = jax.random.PRNGKey(0)
    k1, k2 = jax.random.split(key)

    # module "config" — deterministic synthetic parameters
    center = jnp.array([0.0, 0.0, -2.0], jnp.float32)   # SphereSDF.center
    radius = jnp.float32(1.0)                            # SphereSDF.radius
    alpha = jnp.float32(0.9)                             # SDFVolume.alpha
    beta = jnp.float32(0.05)                             # SDFVolume.beta
    feature_param = jnp.ones((3,), jnp.float32)          # torch.ones_like(feature.val)
    params = pack_params(center, radius, alpha, beta, feature_param)  # (10,)

    # ray bundle: 4 rays x 64 samples per ray
    n_rays, n_samples = 4, 64
    N = n_rays * n_samples
    sample_points = 1.5 * jax.random.normal(
        k1, (n_rays, n_samples, 3), jnp.float32) + center[None, None, :]
    steps = jnp.abs(jax.random.uniform(
        k2, (n_rays, n_samples), jnp.float32)) * 0.1 + 0.01
    sample_lengths = jnp.cumsum(steps, axis=-1)[..., None]            # [R, S, 1]

    ref = sdf_volume_reference(sample_points, sample_lengths,
                               center, radius, alpha, beta, feature_param)

    # 1) default fast path: f32, coord-major feature output [3, N]
    out = sdf_volume_forward(sample_points, sample_lengths, params)
    jax.block_until_ready(out)
    assert out["density"].shape == (N, 1)
    assert out["feature"].shape == (3, N)
    assert jnp.allclose(out["density"], ref["density"], rtol=1e-5, atol=1e-5)
    assert jnp.allclose(out["feature"].T, ref["feature"], rtol=1e-5, atol=1e-5)

    # 2) coord-major points input + module-compatible [N, 3] feature output
    pts_cm = jnp.transpose(sample_points, (2, 0, 1))                  # [3, R, S]
    out2 = sdf_volume_forward(pts_cm, sample_lengths, params,
                              points_layout="coord_major",
                              feature_layout="point_major")
    jax.block_until_ready(out2)
    assert out2["feature"].shape == (N, 3)
    assert jnp.allclose(out2["density"], ref["density"], rtol=1e-5, atol=1e-5)
    assert jnp.allclose(out2["feature"], ref["feature"], rtol=1e-5, atol=1e-5)

    # 3) N not a multiple of 128 exercises the lane-pad / full-dim-block path
    r2, s2 = 3, 37                                                    # N2 = 111
    sp2 = 1.2 * jax.random.normal(
        jax.random.PRNGKey(1), (r2, s2, 3), jnp.float32) + center[None, None, :]
    st2 = jnp.abs(jax.random.uniform(
        jax.random.PRNGKey(2), (r2, s2), jnp.float32)) * 0.1 + 0.01
    sl2 = jnp.cumsum(st2, axis=-1)[..., None]
    ref2 = sdf_volume_reference(sp2, sl2, center, radius, alpha, beta,
                                feature_param)
    out3 = sdf_volume_forward(sp2, sl2, params)
    jax.block_until_ready(out3)
    assert jnp.allclose(out3["density"], ref2["density"], rtol=1e-5, atol=1e-5)
    assert jnp.allclose(out3["feature"].T, ref2["feature"], rtol=1e-5, atol=1e-5)

    # 4) bf16 outputs (halves output HBM traffic; math stays f32 in-kernel)
    out4 = sdf_volume_forward(sample_points, sample_lengths, params,
                              out_dtype=jnp.bfloat16)
    jax.block_until_ready(out4)
    assert jnp.allclose(out4["density"].astype(jnp.float32), ref["density"],
                        rtol=2e-2, atol=2e-2)
    assert jnp.allclose(out4["feature"].T.astype(jnp.float32), ref["feature"],
                        rtol=2e-2, atol=2e-2)

    print("KERNEL_OK")
</pallas_src>

<mosaic_0001>
module attributes {stable_mosaic.version = 11 : i64} {
  func.func @sdf_volume_kernel(%arg0: i32, %arg1: memref<10xf32, #tpu.memory_space<smem>>, %arg2: memref<3x2x128xf32, #tpu.memory_space<vmem>>, %arg3: memref<2x128xf32, #tpu.memory_space<vmem>>, %arg4: memref<2x128xf32, #tpu.memory_space<vmem>>, %arg5: memref<3x2x128xf32, #tpu.memory_space<vmem>>) attributes {dimension_semantics = [#tpu.dimension_semantics<parallel>], iteration_bounds = array<i64: 1>, scalar_prefetch = 0 : i64, scratch_operands = 0 : i64, tpu.core_type = #tpu.core_type<tc>, window_params = [{transform_indices = @transform_0, window_bounds = array<i64: 10>}, {transform_indices = @transform_1, window_bounds = array<i64: 3, 2, 128>}, {transform_indices = @transform_2, window_bounds = array<i64: 2, 128>}, {transform_indices = @transform_3, window_bounds = array<i64: 2, 128>}, {transform_indices = @transform_4, window_bounds = array<i64: 3, 2, 128>}]} {
    %c0 = arith.constant 0 : index
    %0 = memref.load %arg1[%c0] : memref<10xf32, #tpu.memory_space<smem>>
    %c1 = arith.constant 1 : index
    %1 = memref.load %arg1[%c1] : memref<10xf32, #tpu.memory_space<smem>>
    %c2 = arith.constant 2 : index
    %2 = memref.load %arg1[%c2] : memref<10xf32, #tpu.memory_space<smem>>
    %c3 = arith.constant 3 : index
    %3 = memref.load %arg1[%c3] : memref<10xf32, #tpu.memory_space<smem>>
    %c4 = arith.constant 4 : index
    %4 = memref.load %arg1[%c4] : memref<10xf32, #tpu.memory_space<smem>>
    %c5 = arith.constant 5 : index
    %5 = memref.load %arg1[%c5] : memref<10xf32, #tpu.memory_space<smem>>
    %c6 = arith.constant 6 : index
    %6 = memref.load %arg1[%c6] : memref<10xf32, #tpu.memory_space<smem>>
    %c7 = arith.constant 7 : index
    %7 = memref.load %arg1[%c7] : memref<10xf32, #tpu.memory_space<smem>>
    %c8 = arith.constant 8 : index
    %8 = memref.load %arg1[%c8] : memref<10xf32, #tpu.memory_space<smem>>
    %c9 = arith.constant 9 : index
    %9 = memref.load %arg1[%c9] : memref<10xf32, #tpu.memory_space<smem>>
    %c0_0 = arith.constant 0 : index
    %c0_1 = arith.constant 0 : index
    %c0_2 = arith.constant 0 : index
    %10 = vector.load %arg2[%c0_0, %c0_1, %c0_2] : memref<3x2x128xf32, #tpu.memory_space<vmem>>, vector<1x2x128xf32>
    %11 = vector.shape_cast %10 : vector<1x2x128xf32> to vector<2x128xf32>
    %12 = vector.broadcast %0 : f32 to vector<2x128xf32>
    %13 = arith.subf %11, %12 : vector<2x128xf32>
    %c1_3 = arith.constant 1 : index
    %c0_4 = arith.constant 0 : index
    %c0_5 = arith.constant 0 : index
    %14 = vector.load %arg2[%c1_3, %c0_4, %c0_5] : memref<3x2x128xf32, #tpu.memory_space<vmem>>, vector<1x2x128xf32>
    %15 = vector.shape_cast %14 : vector<1x2x128xf32> to vector<2x128xf32>
    %16 = vector.broadcast %1 : f32 to vector<2x128xf32>
    %17 = arith.subf %15, %16 : vector<2x128xf32>
    %c2_6 = arith.constant 2 : index
    %c0_7 = arith.constant 0 : index
    %c0_8 = arith.constant 0 : index
    %18 = vector.load %arg2[%c2_6, %c0_7, %c0_8] : memref<3x2x128xf32, #tpu.memory_space<vmem>>, vector<1x2x128xf32>
    %19 = vector.shape_cast %18 : vector<1x2x128xf32> to vector<2x128xf32>
    %20 = vector.broadcast %2 : f32 to vector<2x128xf32>
    %21 = arith.subf %19, %20 : vector<2x128xf32>
    %22 = arith.mulf %13, %13 : vector<2x128xf32>
    %23 = arith.mulf %17, %17 : vector<2x128xf32>
    %24 = arith.addf %22, %23 : vector<2x128xf32>
    %25 = arith.mulf %21, %21 : vector<2x128xf32>
    %26 = arith.addf %24, %25 : vector<2x128xf32>
    %27 = math.sqrt %26 : vector<2x128xf32>
    %28 = vector.broadcast %3 : f32 to vector<2x128xf32>
    %29 = arith.subf %27, %28 : vector<2x128xf32>
    %30 = math.absf %29 : vector<2x128xf32>
    %31 = vector.broadcast %6 : f32 to vector<2x128xf32>
    %32 = arith.mulf %30, %31 : vector<2x128xf32>
    %33 = math.exp %32 : vector<2x128xf32>
    %34 = vector.broadcast %4 : f32 to vector<2x128xf32>
    %35 = arith.mulf %34, %33 : vector<2x128xf32>
    %cst = arith.constant 0.000000e+00 : f32
    %36 = vector.broadcast %cst : f32 to vector<2x128xf32>
    %37 = arith.cmpf ogt, %29, %36 : vector<2x128xf32>
    %38 = vector.broadcast %5 : f32 to vector<2x128xf32>
    %39 = arith.subf %38, %35 : vector<2x128xf32>
    %40 = arith.select %37, %35, %39 : vector<2x128xi1>, vector<2x128xf32>
    %cst_9 = arith.constant 0.000000e+00 : f32
    %41 = vector.broadcast %cst_9 : f32 to vector<2x128xf32>
    %42 = arith.subf %41, %40 : vector<2x128xf32>
    %43 = math.log1p %42 : vector<2x128xf32>
    %cst_10 = arith.constant 0.000000e+00 : f32
    %44 = vector.broadcast %cst_10 : f32 to vector<2x128xf32>
    %45 = arith.subf %44, %43 : vector<2x128xf32>
    %c0_11 = arith.constant 0 : index
    %c0_12 = arith.constant 0 : index
    %46 = vector.load %arg3[%c0_11, %c0_12] : memref<2x128xf32, #tpu.memory_space<vmem>>, vector<2x128xf32>
    %47 = arith.divf %45, %46 : vector<2x128xf32>
    %c0_13 = arith.constant 0 : index
    %c0_14 = arith.constant 0 : index
    %48 = vector.load %arg4[%c0_13, %c0_14] : memref<2x128xf32, #tpu.memory_space<vmem>>, vector<2x128xf32>
    tpu.vector_store %arg4[%c0_13, %c0_14], %47 {strides = array<i32>} : memref<2x128xf32, #tpu.memory_space<vmem>>, vector<2x128xf32>,
    %49 = math.absf %13 : vector<2x128xf32>
    %cst_15 = arith.constant 2.000000e-02 : f32
    %cst_16 = arith.constant 9.800000e-01 : f32
    %50 = vector.broadcast %cst_15 : f32 to vector<2x128xf32>
    %51 = arith.maximumf %50, %49 : vector<2x128xf32>
    %52 = vector.broadcast %cst_16 : f32 to vector<2x128xf32>
    %53 = arith.minimumf %52, %51 : vector<2x128xf32>
    %54 = vector.broadcast %7 : f32 to vector<2x128xf32>
    %55 = arith.mulf %53, %54 : vector<2x128xf32>
    %c0_17 = arith.constant 0 : index
    %c0_18 = arith.constant 0 : index
    %c0_19 = arith.constant 0 : index
    %56 = vector.load %arg5[%c0_17, %c0_18, %c0_19] : memref<3x2x128xf32, #tpu.memory_space<vmem>>, vector<1x2x128xf32>
    %57 = vector.shape_cast %56 : vector<1x2x128xf32> to vector<2x128xf32>
    %58 = vector.shape_cast %55 : vector<2x128xf32> to vector<1x2x128xf32>
    tpu.vector_store %arg5[%c0_17, %c0_18, %c0_19], %58 {strides = array<i32>} : memref<3x2x128xf32, #tpu.memory_space<vmem>>, vector<1x2x128xf32>,
    %59 = math.absf %17 : vector<2x128xf32>
    %cst_20 = arith.constant 2.000000e-02 : f32
    %cst_21 = arith.constant 9.800000e-01 : f32
    %60 = vector.broadcast %cst_20 : f32 to vector<2x128xf32>
    %61 = arith.maximumf %60, %59 : vector<2x128xf32>
    %62 = vector.broadcast %cst_21 : f32 to vector<2x128xf32>
    %63 = arith.minimumf %62, %61 : vector<2x128xf32>
    %64 = vector.broadcast %8 : f32 to vector<2x128xf32>
    %65 = arith.mulf %63, %64 : vector<2x128xf32>
    %c1_22 = arith.constant 1 : index
    %c0_23 = arith.constant 0 : index
    %c0_24 = arith.constant 0 : index
    %66 = vector.load %arg5[%c1_22, %c0_23, %c0_24] : memref<3x2x128xf32, #tpu.memory_space<vmem>>, vector<1x2x128xf32>
    %67 = vector.shape_cast %66 : vector<1x2x128xf32> to vector<2x128xf32>
    %68 = vector.shape_cast %65 : vector<2x128xf32> to vector<1x2x128xf32>
    tpu.vector_store %arg5[%c1_22, %c0_23, %c0_24], %68 {strides = array<i32>} : memref<3x2x128xf32, #tpu.memory_space<vmem>>, vector<1x2x128xf32>,
    %69 = math.absf %21 : vector<2x128xf32>
    %cst_25 = arith.constant 2.000000e-02 : f32
    %cst_26 = arith.constant 9.800000e-01 : f32
    %70 = vector.broadcast %cst_25 : f32 to vector<2x128xf32>
    %71 = arith.maximumf %70, %69 : vector<2x128xf32>
    %72 = vector.broadcast %cst_26 : f32 to vector<2x128xf32>
    %73 = arith.minimumf %72, %71 : vector<2x128xf32>
    %74 = vector.broadcast %9 : f32 to vector<2x128xf32>
    %75 = arith.mulf %73, %74 : vector<2x128xf32>
    %c2_27 = arith.constant 2 : index
    %c0_28 = arith.constant 0 : index
    %c0_29 = arith.constant 0 : index
    %76 = vector.load %arg5[%c2_27, %c0_28, %c0_29] : memref<3x2x128xf32, #tpu.memory_space<vmem>>, vector<1x2x128xf32>
    %77 = vector.shape_cast %76 : vector<1x2x128xf32> to vector<2x128xf32>
    %78 = vector.shape_cast %75 : vector<2x128xf32> to vector<1x2x128xf32>
    tpu.vector_store %arg5[%c2_27, %c0_28, %c0_29], %78 {strides = array<i32>} : memref<3x2x128xf32, #tpu.memory_space<vmem>>, vector<1x2x128xf32>,
    return
  }
  func.func @transform_0(%arg0: i32) -> i32 {
    %c0_i32 = arith.constant 0 : i32
    %c0_i32_0 = arith.constant 0 : i32
    return %c0_i32 : i32
  }
  func.func @transform_1(%arg0: i32) -> (i32, i32, i32) {
    %c0_i32 = arith.constant 0 : i32
    %c0_i32_0 = arith.constant 0 : i32
    %c0_i32_1 = arith.constant 0 : i32
    return %c0_i32, %arg0, %c0_i32_0 : i32, i32, i32
  }
  func.func @transform_2(%arg0: i32) -> (i32, i32) {
    %c0_i32 = arith.constant 0 : i32
    %c0_i32_0 = arith.constant 0 : i32
    return %arg0, %c0_i32 : i32, i32
  }
  func.func @transform_3(%arg0: i32) -> (i32, i32) {
    %c0_i32 = arith.constant 0 : i32
    %c0_i32_0 = arith.constant 0 : i32
    return %arg0, %c0_i32 : i32, i32
  }
  func.func @transform_4(%arg0: i32) -> (i32, i32, i32) {
    %c0_i32 = arith.constant 0 : i32
    %c0_i32_0 = arith.constant 0 : i32
    %c0_i32_1 = arith.constant 0 : i32
    return %c0_i32, %arg0, %c0_i32_0 : i32, i32, i32
  }
}

</mosaic_0001>

<llo_original>
// kernel: sdf_volume_forward.1
$region0: #{sdf_volume_forward.1}
  #allocation0 [shape = 'u32[]', space=smem, size = 0x4, offset = 0x4, fixed_abs, tag = 'smem constant byte address 0x4 - core index']
  #allocation1 [shape = 'u32[144,128]{1,0:T(1,128)}', space=vmem, size = 0x12000, scoped, tag = 'internal scratch']
  %s0 = inlined_call_operand.vmem [shape: f32[10], index: 0, kind: input, shape index: {}]
  %s1 = inlined_call_operand.vmem [shape: f32[3,2,128], index: 1, kind: input, shape index: {}]
  %s2 = inlined_call_operand.vmem [shape: f32[2,128], index: 2, kind: input, shape index: {}]
  %s3 = inlined_call_operand.hbm [shape: f32[2,128], index: 3, kind: output, shape index: {0}]
  %s4 = inlined_call_operand.vmem [shape: f32[3,2,128], index: 4, kind: output, shape index: {1}]
  %5 = xla_tuple %s3, %s4
  %s6 = sld [smem:[#allocation0]]
  $region34: #{sdf_volume_forward.1} parent=0
    _
  %s8 = ssub.s32 1, %s6
  %s9 = scalar_select 0, %s8, %s6
  $region1: #{sdf_volume_forward.1} parent=0
    #allocation2 [shape = 'u8[512]{0}', space=smem, size = 0x200, scoped, tag = 'input window, operand 0, single buffered']
    #allocation3 [shape = 's32[1]{0}', space=sflag, size = 0x4, scoped, tag = 'scoped memory for sdf_volume_forward.1']
    #allocation4 [shape = 's32[1]{0}', space=sflag, size = 0x4, scoped, tag = 'scoped memory for sdf_volume_forward.1']
    #allocation5 [shape = 'u8[1024]{0}', space=vmem, size = 0x400, scoped, tag = 'output window, operand 0, single buffered']
    %10 = vsyncpa [#allocation4], 0
    %11 = vsyncpa [#allocation3], 0
    // Predicated region
    $region2: #{sdf_volume_forward.1} parent=1 // pred_check
      _
    $region3: #{sdf_volume_forward.1} parent=1 // pred_check_branch
      %13 = sbr.rel (0) target = $region5
    $region4: #{sdf_volume_forward.1} parent=1 // pred_region
      %s15 = ssub.s32 16, 16
      %16 = vsyncadd [#allocation4], %s15
      %s18 = sshll.u32 %s0, 4
      %s19 = int_to_ptr.vmem [resolvable:$true] %s18
      %21 = dma.vmem_to_smem %s19, 16, [#allocation2], [#allocation4]
    $region5: #{sdf_volume_forward.1} parent=1 // pred_fallthru
      _
    // Predicated region
    $region6: #{sdf_volume_forward.1} parent=1 // pred_check
      _
    $region7: #{sdf_volume_forward.1} parent=1 // pred_check_branch
      %23 = sbr.rel (0) target = $region9
    $region8: #{sdf_volume_forward.1} parent=1 // pred_region
      _
    $region9: #{sdf_volume_forward.1} parent=1 // pred_fallthru
      _
    // Predicated region
    $region10: #{sdf_volume_forward.1} parent=1 // pred_check
      _
    $region11: #{sdf_volume_forward.1} parent=1 // pred_check_branch
      %25 = sbr.rel (0) target = $region13
    $region12: #{sdf_volume_forward.1} parent=1 // pred_region
      _
    $region13: #{sdf_volume_forward.1} parent=1 // pred_fallthru
      _
    // Predicated region
    $region14: #{sdf_volume_forward.1} parent=1 // pred_check
      _
    $region15: #{sdf_volume_forward.1} parent=1 // pred_check_branch
      %27 = sbr.rel (0) target = $region17
    $region16: #{sdf_volume_forward.1} parent=1 // pred_region
      %28 = dma.done [#allocation4], 16
    $region17: #{sdf_volume_forward.1} parent=1 // pred_fallthru
      _
    %29 = sfence
    %s30 = sld [smem:[#allocation2]]
    %s31 = sld [smem:[#allocation2 + $0x1]]
    %s32 = sld [smem:[#allocation2 + $0x2]]
    %s33 = sld [smem:[#allocation2 + $0x3]]
    %s34 = sld [smem:[#allocation2 + $0x4]]
    %s35 = sld [smem:[#allocation2 + $0x5]]
    %s36 = sld [smem:[#allocation2 + $0x6]]
    %s37 = sld [smem:[#allocation2 + $0x7]]
    %s38 = sld [smem:[#allocation2 + $0x8]]
    %s39 = sld [smem:[#allocation2 + $0x9]]
    %v40 = vld [vmem:[%s1] sm:$0x3]
    %v41 = vstv %s30
    %v42 = vsub.f32 %v40, %v41
    %s43 = scalar_lea.vmem %s1, 2
    %v44 = vld [vmem:[%s43] sm:$0x3]
    %v45 = vstv %s31
    %v46 = vsub.f32 %v44, %v45
    %s47 = scalar_lea.vmem %s1, 4
    %v48 = vld [vmem:[%s47] sm:$0x3]
    %v49 = vstv %s32
    %v50 = vsub.f32 %v48, %v49
    %v51 = vmul.f32 %v42, %v42
    %v52 = vmul.f32 %v46, %v46
    %v53 = vadd.f32 %v51, %v52
    %v54 = vmul.f32 %v50, %v50
    %v55 = vadd.f32 %v53, %v54
    %v56 = vrsqrt.pop %v55
    %v57 = vmul.f32 %v55, %v56
    %vm58 = vcmp.eq.f32.partialorder %v55, inf
    %v59 = vsel %vm58, %v55, %v57
    %vm60 = vcmp.eq.f32.partialorder %v55, 0.0
    %v61 = vand.u32 %v55, 2147483648
    %v62 = vsel %vm60, %v61, %v59
    %v63 = vstv %s33
    %v64 = vsub.f32 %v62, %v63
    %v65 = vand.u32 2147483647, %v64
    %v66 = vstv %s36
    %v67 = vmul.f32 %v65, %v66
    %v68 = vmul.f32 %v67, 1.442695
    %v69 = vpow.pop %v68
    %v70 = vstv %s34
    %v71 = vmul.f32 %v70, %v69
    %vm72 = vcmp.gt.f32.partialorder %v64, 0.0
    %v73 = vstv %s35
    %v74 = vsub.f32 %v73, %v71
    %v75 = vsel %vm72, %v71, %v74
    %v76 = vsub.f32 0.0, %v75
    %v77 = vadd.f32 %v76, 1.0
    %v78 = vlog2.pop %v77
    %v79 = vmul.f32 %v78, 0.6931472
    %v80 = vmul.f32 -0.5, %v76
    %v81 = vadd.f32 %v80, 1.0
    %v82 = vmul.f32 %v81, %v76
    %v83 = vand.u32 2147483647, %v76
    %vm84 = vcmp.lt.f32.partialorder %v83, 0.0004427343
    %v85 = vsel %vm84, %v82, %v79
    %v86 = vsub.f32 0.0, %v85
    %v87 = vld [vmem:[%s2] sm:$0x3]
    %v88 = vrcp.pop %v87
    %v89 = vmul.f32 %v86, %v88
    %90 = vst [vmem:[#allocation5] sm:$0x3] %v89
    %v91 = vand.u32 2147483647, %v42
    %v92 = vmax.f32 %v91, 0.02
    %v93 = vmin.f32 %v92, 0.98
    %v94 = vstv %s37
    %v95 = vmul.f32 %v93, %v94
    %96 = vst [vmem:[%s4] sm:$0x3] %v95
    %v97 = vand.u32 2147483647, %v46
    %v98 = vmax.f32 %v97, 0.02
    %v99 = vmin.f32 %v98, 0.98
    %v100 = vstv %s38
    %v101 = vmul.f32 %v99, %v100
    %s102 = scalar_lea.vmem %s4, 2
    %103 = vst [vmem:[%s102] sm:$0x3] %v101
    %v104 = vand.u32 2147483647, %v50
    %v105 = vmax.f32 %v104, 0.02
    %v106 = vmin.f32 %v105, 0.98
    %v107 = vstv %s39
    %v108 = vmul.f32 %v106, %v107
    %s109 = scalar_lea.vmem %s4, 4
    %110 = vst [vmem:[%s109] sm:$0x3] %v108
    // Predicated region
    $region18: #{sdf_volume_forward.1} parent=1 // pred_check
      _
    $region19: #{sdf_volume_forward.1} parent=1 // pred_check_branch
      %112 = sbr.rel (0) target = $region21
    $region20: #{sdf_volume_forward.1} parent=1 // pred_region
      %s114 = ssub.s32 32, 32
      %115 = vsyncadd [#allocation3], %s114
      %s117 = sshll.u32 [#allocation5], 4
      %s118 = int_to_ptr.vmem [resolvable:$true] %s117
      %120 = dma.vmem_to_hbm [thread:$0]  %s118, 32, %s3, [#allocation3]
    $region21: #{sdf_volume_forward.1} parent=1 // pred_fallthru
      _
    // Predicated region
    $region22: #{sdf_volume_forward.1} parent=1 // pred_check
      _
    $region23: #{sdf_volume_forward.1} parent=1 // pred_check_branch
      %122 = sbr.rel (0) target = $region25
    $region24: #{sdf_volume_forward.1} parent=1 // pred_region
      _
    $region25: #{sdf_volume_forward.1} parent=1 // pred_fallthru
      _
    // Predicated region
    $region26: #{sdf_volume_forward.1} parent=1 // pred_check
      _
    $region27: #{sdf_volume_forward.1} parent=1 // pred_check_branch
      %124 = sbr.rel (0) target = $region29
    $region28: #{sdf_volume_forward.1} parent=1 // pred_region
      %125 = dma.done [#allocation3], 32
    $region29: #{sdf_volume_forward.1} parent=1 // pred_fallthru
      _
    // Predicated region
    $region30: #{sdf_volume_forward.1} parent=1 // pred_check
      _
    $region31: #{sdf_volume_forward.1} parent=1 // pred_check_branch
      %127 = sbr.rel (0) target = $region33
    $region32: #{sdf_volume_forward.1} parent=1 // pred_region
      _
    $region33: #{sdf_volume_forward.1} parent=1 // pred_fallthru
      _
    %128 = vsyncpa [#allocation3], 1
    %129 = vsyncpa [#allocation4], 1

</llo_original>
